<compile_context>
chip_gen: v5e
topology: v5e:2x2
jax: 0.10.0
libtpu: 0.0.40
codegen_flags: <defaults>
</compile_context>

<pallas_src>
import math

import jax
import jax.numpy as jnp
from jax import lax
from jax.experimental import pallas as pl
from jax.experimental.pallas import tpu as pltpu

# ---- config (small, TPU-friendly shapes consistent with the module) ----
BATCH = 2
SEQ = 16
HIDDEN = 128
NUM_HEADS = 4
NUM_KV_HEADS = 2
HEAD_DIM = 64
INTERMEDIATE = 256
N_REP = NUM_HEADS // NUM_KV_HEADS
RMS_EPS = 1e-6
ROPE_THETA = 10000.0
BS = BATCH * SEQ
HALF = HEAD_DIM // 2


# ---------------------------------------------------------------------------
# Kernel
# ---------------------------------------------------------------------------
def _decoder_layer_kernel(x_ref,
                          cos_q_ref, sin_a_q_ref, sin_b_q_ref,
                          cos_k_ref, sin_a_k_ref, sin_b_k_ref,
                          rms1_ref, wq_ref, wk_ref, wv_ref, wo_ref,
                          rms2_ref, wg_ref, wu_ref, wd_ref,
                          out_ref):
    f32 = jnp.float32
    bf16 = jnp.bfloat16

    x = x_ref[...]                               # (BS, H) f32 residual stream

    # ---------------- input RMSNorm (f32) -----------------------------------
    g1 = 1.0 + rms1_ref[...]                     # (1, H)
    var = jnp.mean(x * x, axis=-1, keepdims=True)
    h = x * lax.rsqrt(var + RMS_EPS) * g1        # (BS, H)

    # ---------------- QKV projections: one MXU call each (bf16 in, f32 acc) -
    hb = h.astype(bf16)
    q = jnp.dot(hb, wq_ref[...], preferred_element_type=f32)   # (BS, NH*HD)
    k = jnp.dot(hb, wk_ref[...], preferred_element_type=f32)   # (BS, NKV*HD)
    v = jnp.dot(hb, wv_ref[...], preferred_element_type=f32)   # (BS, NKV*HD)

    # ---------------- RoPE: constants pre-folded, 2 XLU rolls + VPU FMAs ----
    # sin_a pairs with the "+HALF" fetch, sin_b with the "-HALF" fetch; the
    # pairing with the two roll shifts was fixed at setup (roll-direction
    # probe), and all wrap-around / cross-head lanes are zeroed in the slabs.
    def rope(t, cos_t, sin_a, sin_b):
        L = t.shape[-1]
        return (t * cos_t
                + pltpu.roll(t, shift=L - HALF, axis=1) * sin_a
                + pltpu.roll(t, shift=HALF, axis=1) * sin_b)

    qr = rope(q, cos_q_ref[...], sin_a_q_ref[...], sin_b_q_ref[...]).astype(bf16)
    kr = rope(k, cos_k_ref[...], sin_a_k_ref[...], sin_b_k_ref[...]).astype(bf16)
    vb = v.astype(bf16)

    # ---------------- regroup heads for kv-batched attention ----------------
    # Rows are reordered (head-major) with leading-dim-only reshapes so no
    # 4-D transposes are needed.
    q_rows = jnp.concatenate(
        [qr[:, hh * HEAD_DIM:(hh + 1) * HEAD_DIM] for hh in range(NUM_HEADS)],
        axis=0)                                            # (NH*BS, HD)
    qg = q_rows.reshape(NUM_KV_HEADS, N_REP * BS, HEAD_DIM)
    k_rows = jnp.concatenate(
        [kr[:, g * HEAD_DIM:(g + 1) * HEAD_DIM] for g in range(NUM_KV_HEADS)],
        axis=0)                                            # (NKV*BS, HD)
    kg = k_rows.reshape(NUM_KV_HEADS, BS, HEAD_DIM)
    v_rows = jnp.concatenate(
        [vb[:, g * HEAD_DIM:(g + 1) * HEAD_DIM] for g in range(NUM_KV_HEADS)],
        axis=0)
    vg = v_rows.reshape(NUM_KV_HEADS, BS, HEAD_DIM)

    # ---------------- scores: ONE batched MXU call over kv heads ------------
    s = jnp.einsum('gqd,gkd->gqk', qg, kg,
                   preferred_element_type=f32)             # (NKV, N_REP*BS, BS)

    # block-diagonal causal mask, built once in-kernel from iota (kept in f32)
    row = lax.broadcasted_iota(jnp.int32, (N_REP * BS, BS), 0) % BS
    col = lax.broadcasted_iota(jnp.int32, (N_REP * BS, BS), 1)
    keep = ((row // SEQ) == (col // SEQ)) & ((row % SEQ) >= (col % SEQ))
    mask = jnp.where(keep, 0.0, -1e9).astype(f32)          # (N_REP*BS, BS)
    s = s + mask[None, :, :]

    # ---------------- ONE stacked softmax over all heads --------------------
    m = jnp.max(s, axis=-1, keepdims=True)
    p = jnp.exp(s - m)
    denom = jnp.sum(p, axis=-1, keepdims=True)
    p = p * pl.reciprocal(denom, approx=True)

    # ---------------- P @ V: ONE batched MXU call ---------------------------
    o = jnp.einsum('gqk,gkd->gqd', p.astype(bf16), vg,
                   preferred_element_type=f32)             # (NKV, N_REP*BS, HD)

    # lay heads out as one (BS, NH*HD) slab -> single o_proj matmul (K=NH*HD)
    o2 = o.reshape(NUM_HEADS * BS, HEAD_DIM)               # leading-dim merge
    o_slab = jnp.concatenate(
        [o2[hh * BS:(hh + 1) * BS, :] for hh in range(NUM_HEADS)], axis=1)
    attn = jnp.dot(o_slab.astype(bf16), wo_ref[...],
                   preferred_element_type=f32)             # (BS, H)

    # ---------------- residual + post-attention RMSNorm (f32) ---------------
    h1 = x + attn
    g2 = 1.0 + rms2_ref[...]
    var2 = jnp.mean(h1 * h1, axis=-1, keepdims=True)
    h2 = h1 * lax.rsqrt(var2 + RMS_EPS) * g2

    # ---------------- MLP: down( gelu_tanh(gate(x)) * up(x) ) ---------------
    h2b = h2.astype(bf16)
    gate = jnp.dot(h2b, wg_ref[...], preferred_element_type=f32)
    up = jnp.dot(h2b, wu_ref[...], preferred_element_type=f32)
    act = jax.nn.gelu(gate, approximate=True) * up          # f32 (v5e-safe)
    mlp = jnp.dot(act.astype(bf16), wd_ref[...], preferred_element_type=f32)

    out_ref[...] = (h1 + mlp).astype(out_ref.dtype)


# ---------------------------------------------------------------------------
# Wrapper
# ---------------------------------------------------------------------------
def gemma_decoder_layer(x, rope_slabs, params):
    """x: (B, S, H) f32.  rope_slabs: 6 pre-tiled f32 constant slabs.
    params: RMSNorm weights in f32, projection weights already in bf16."""
    B, S, H = x.shape
    cos_q, sin_a_q, sin_b_q, cos_k, sin_a_k, sin_b_k = rope_slabs
    rms1_w, wq, wk, wv, wo, rms2_w, wg, wu, wd = params

    x2 = x.reshape(B * S, H)   # fold batch into matmul rows

    def full_spec(shape):
        return pl.BlockSpec(shape, lambda i, _s=len(shape): (0,) * _s)

    out = pl.pallas_call(
        _decoder_layer_kernel,
        out_shape=jax.ShapeDtypeStruct((B * S, H), x.dtype),
        grid=(1,),   # one fat step; weights fetched exactly once
        in_specs=[
            full_spec((B * S, H)),            # x (residual stream)
            full_spec(cos_q.shape),           # RoPE q cos (scale folded)
            full_spec(sin_a_q.shape),         # RoPE q sin ("+HALF" partner)
            full_spec(sin_b_q.shape),         # RoPE q sin ("-HALF" partner)
            full_spec(cos_k.shape),           # RoPE k cos
            full_spec(sin_a_k.shape),
            full_spec(sin_b_k.shape),
            full_spec((1, H)),                # input RMSNorm weight
            full_spec(wq.shape),              # Wq
            full_spec(wk.shape),              # Wk
            full_spec(wv.shape),              # Wv
            full_spec(wo.shape),              # Wo
            full_spec((1, H)),                # post-attn RMSNorm weight
            full_spec(wg.shape),              # W_gate
            full_spec(wu.shape),              # W_up
            full_spec(wd.shape),              # W_down
        ],
        out_specs=full_spec((B * S, H)),
        compiler_params=pltpu.CompilerParams(
            dimension_semantics=("arbitrary",)),
    )(x2, cos_q, sin_a_q, sin_b_q, cos_k, sin_a_k, sin_b_k,
      rms1_w, wq, wk, wv, wo, rms2_w, wg, wu, wd)

    return out.reshape(B, S, H)


# ---------------------------------------------------------------------------
# RoPE constant preparation (setup time, outside the hot path)
# ---------------------------------------------------------------------------
def _pltpu_roll_is_numpy_semantics():
    """One-shot hardware probe: does pltpu.roll(x, s, axis) == jnp.roll(x, s, axis)?
    Only used to decide which pre-folded sin slab pairs with which static
    rotation shift; the kernel itself is identical either way."""
    x = jnp.arange(8 * 128, dtype=jnp.float32).reshape(8, 128)

    def probe_kernel(x_ref, o_ref):
        o_ref[...] = pltpu.roll(x_ref[...], shift=1, axis=1)

    y = pl.pallas_call(
        probe_kernel,
        out_shape=jax.ShapeDtypeStruct((8, 128), jnp.float32))(x)
    return bool(jnp.array_equal(y, jnp.roll(x, 1, axis=1)))


def make_rope_slabs(cos, sin, n_heads, batch, scale, roll_is_numpy):
    """Pre-tile cos/sin (S, HEAD_DIM) to (batch*S, n_heads*HEAD_DIM) slabs with
    rotate_half's sign, the lower/upper-half select and `scale` folded in.

    In-kernel:  rope(t) = t*cos + roll(t, L-HALF)*sin_a + roll(t, HALF)*sin_b.
    """
    d = jnp.arange(HEAD_DIM)
    lower = (d < HALF)[None, :]                     # (1, HD)
    # lower-half output lanes need  -t[j+HALF]*sin ;  upper-half need +t[j-HALF]*sin
    sin_plus = jnp.where(lower, -sin, 0.0)          # coeff of the "+HALF" fetch
    sin_minus = jnp.where(lower, 0.0, sin)          # coeff of the "-HALF" fetch

    if roll_is_numpy:
        # roll(t, L-HALF)[j] = t[j+HALF],  roll(t, HALF)[j] = t[j-HALF]
        sin_a, sin_b = sin_plus, sin_minus
    else:
        sin_a, sin_b = sin_minus, sin_plus

    def tile(a):
        return jnp.tile(a * scale, (batch, n_heads)).astype(jnp.float32)

    return tile(cos), tile(sin_a), tile(sin_b)


# ---------------------------------------------------------------------------
# Pure-JAX f32 reference (mirrors the PyTorch forward)
# ---------------------------------------------------------------------------
def _rotate_half(t):
    t1 = t[..., :t.shape[-1] // 2]
    t2 = t[..., t.shape[-1] // 2:]
    return jnp.concatenate([-t2, t1], axis=-1)


def reference_decoder_layer(x, attention_mask, cos, sin, params):
    rms1_w, wq, wk, wv, wo, rms2_w, wg, wu, wd = params
    B, S, H = x.shape

    def rmsnorm(t, w):
        var = jnp.mean(t * t, axis=-1, keepdims=True)
        return t * lax.rsqrt(var + RMS_EPS) * (1.0 + w)

    residual = x
    h = rmsnorm(x, rms1_w)
    q = (h @ wq).reshape(B, S, NUM_HEADS, HEAD_DIM).transpose(0, 2, 1, 3)
    k = (h @ wk).reshape(B, S, NUM_KV_HEADS, HEAD_DIM).transpose(0, 2, 1, 3)
    v = (h @ wv).reshape(B, S, NUM_KV_HEADS, HEAD_DIM).transpose(0, 2, 1, 3)

    cos_b = cos[None, None, :, :]
    sin_b = sin[None, None, :, :]
    q = q * cos_b + _rotate_half(q) * sin_b
    k = k * cos_b + _rotate_half(k) * sin_b

    k = jnp.repeat(k, N_REP, axis=1)
    v = jnp.repeat(v, N_REP, axis=1)

    scores = jnp.einsum('bhqd,bhkd->bhqk', q, k) / math.sqrt(HEAD_DIM)
    scores = scores + attention_mask
    p = jax.nn.softmax(scores.astype(jnp.float32), axis=-1)
    attn = jnp.einsum('bhqk,bhkd->bhqd', p, v)
    attn = attn.transpose(0, 2, 1, 3).reshape(B, S, NUM_HEADS * HEAD_DIM)
    attn = attn @ wo

    h1 = residual + attn
    h2 = rmsnorm(h1, rms2_w)
    mlp = (jax.nn.gelu(h2 @ wg, approximate=True) * (h2 @ wu)) @ wd
    return h1 + mlp


if __name__ == "__main__":
    key = jax.random.PRNGKey(0)
    keys = jax.random.split(key, 10)

    x = jax.random.normal(keys[0], (BATCH, SEQ, HIDDEN), dtype=jnp.float32)

    # parameters (deterministic synthetic init; weights stored as (in, out))
    scale_h = 1.0 / math.sqrt(HIDDEN)
    scale_a = 1.0 / math.sqrt(NUM_HEADS * HEAD_DIM)
    scale_i = 1.0 / math.sqrt(INTERMEDIATE)
    rms1_w = 0.1 * jax.random.normal(keys[1], (1, HIDDEN), dtype=jnp.float32)
    wq = scale_h * jax.random.normal(keys[2], (HIDDEN, NUM_HEADS * HEAD_DIM), dtype=jnp.float32)
    wk = scale_h * jax.random.normal(keys[3], (HIDDEN, NUM_KV_HEADS * HEAD_DIM), dtype=jnp.float32)
    wv = scale_h * jax.random.normal(keys[4], (HIDDEN, NUM_KV_HEADS * HEAD_DIM), dtype=jnp.float32)
    wo = scale_a * jax.random.normal(keys[5], (NUM_HEADS * HEAD_DIM, HIDDEN), dtype=jnp.float32)
    rms2_w = 0.1 * jax.random.normal(keys[6], (1, HIDDEN), dtype=jnp.float32)
    wg = scale_h * jax.random.normal(keys[7], (HIDDEN, INTERMEDIATE), dtype=jnp.float32)
    wu = scale_h * jax.random.normal(keys[8], (HIDDEN, INTERMEDIATE), dtype=jnp.float32)
    wd = scale_i * jax.random.normal(keys[9], (INTERMEDIATE, HIDDEN), dtype=jnp.float32)
    params_f32 = (rms1_w, wq, wk, wv, wo, rms2_w, wg, wu, wd)

    # bf16 MXU-boundary weights, cast ONCE here (review: no per-call cast).
    params_kernel = (rms1_w,
                     wq.astype(jnp.bfloat16), wk.astype(jnp.bfloat16),
                     wv.astype(jnp.bfloat16), wo.astype(jnp.bfloat16),
                     rms2_w,
                     wg.astype(jnp.bfloat16), wu.astype(jnp.bfloat16),
                     wd.astype(jnp.bfloat16))

    # RoPE cos/sin (as GemmaRotaryEmbedding; position_ids = arange(S), shared
    # across batch) -> (S, HEAD_DIM).
    positions = jnp.arange(SEQ, dtype=jnp.float32)
    inv_freq = 1.0 / (ROPE_THETA ** (jnp.arange(0, HEAD_DIM, 2, dtype=jnp.float32) / HEAD_DIM))
    freqs = positions[:, None] * inv_freq[None, :]           # (S, HD/2)
    emb = jnp.concatenate([freqs, freqs], axis=-1)           # (S, HD)
    cos = jnp.cos(emb).astype(jnp.float32)
    sin = jnp.sin(emb).astype(jnp.float32)

    # One-time setup: pin pltpu.roll direction, then pre-fold all RoPE
    # constants (1/sqrt(head_dim) q-scale, rotate_half sign, half-select,
    # head/batch tiling) into DMA-able slabs.
    roll_is_numpy = _pltpu_roll_is_numpy_semantics()
    q_scale = 1.0 / math.sqrt(HEAD_DIM)
    rope_q = make_rope_slabs(cos, sin, NUM_HEADS, BATCH, q_scale, roll_is_numpy)
    rope_k = make_rope_slabs(cos, sin, NUM_KV_HEADS, BATCH, 1.0, roll_is_numpy)
    rope_slabs = rope_q + rope_k

    out = gemma_decoder_layer(x, rope_slabs, params_kernel)
    out = jax.block_until_ready(out)

    # causal additive attention mask [B, 1, S, S] for the f32 reference
    causal = jnp.tril(jnp.ones((SEQ, SEQ), dtype=bool))
    attention_mask = jnp.where(causal, 0.0, -1e9).astype(jnp.float32)
    attention_mask = jnp.broadcast_to(attention_mask[None, None], (BATCH, 1, SEQ, SEQ))

    ref = reference_decoder_layer(x, attention_mask, cos, sin, params_f32)
    ref = jax.block_until_ready(ref)

    assert out.shape == (BATCH, SEQ, HIDDEN)
    # Kernel uses bf16 MXU operands (f32 accumulation) + approx reciprocal in
    # the softmax; the reference is pure f32, so allow bf16-level tolerance.
    if not jnp.allclose(out, ref, atol=5e-2, rtol=5e-2):
        max_err = float(jnp.max(jnp.abs(out - ref)))
        raise AssertionError(f"Pallas output mismatch vs reference, max_err={max_err}")

    print("KERNEL_OK")
</pallas_src>

<mosaic_0001>
module attributes {stable_mosaic.version = 11 : i64} {
  func.func @probe_kernel(%arg0: memref<8x128xf32, #tpu.memory_space<vmem>>, %arg1: memref<8x128xf32, #tpu.memory_space<vmem>>) attributes {dimension_semantics = [], scalar_prefetch = 0 : i64, scratch_operands = 0 : i64, tpu.core_type = #tpu.core_type<tc>} {
    %c0 = arith.constant 0 : index
    %c0_0 = arith.constant 0 : index
    %0 = vector.load %arg0[%c0, %c0_0] : memref<8x128xf32, #tpu.memory_space<vmem>>, vector<8x128xf32>
    %c1_i32 = arith.constant 1 : i32
    %1 = tpu.dynamic_rotate %0 by %c1_i32 dim 1 : vector<8x128xf32>, i32 -> vector<8x128xf32>
    %c0_1 = arith.constant 0 : index
    %c0_2 = arith.constant 0 : index
    %2 = vector.load %arg1[%c0_1, %c0_2] : memref<8x128xf32, #tpu.memory_space<vmem>>, vector<8x128xf32>
    tpu.vector_store %arg1[%c0_1, %c0_2], %1 {strides = array<i32>} : memref<8x128xf32, #tpu.memory_space<vmem>>, vector<8x128xf32>,
    return
  }
}

</mosaic_0001>

<llo_original>
// kernel: tpu_custom_call.1
$region0: #{tpu_custom_call.1}
  #allocation0 [shape = 'u32[]', space=smem, size = 0x4, offset = 0x4, fixed_abs, tag = 'smem constant byte address 0x4 - core index']
  #allocation1 [shape = 'u32[72,128]{1,0:T(1,128)}', space=vmem, size = 0x9000, scoped, tag = 'internal scratch']
  %s0 = inlined_call_operand.hbm [shape: f32[8,128], index: 0, kind: input, shape index: {}]
  %s1 = inlined_call_operand.hbm [shape: f32[8,128], index: 1, kind: output, shape index: {}]
  %s2 = sld [smem:[#allocation0]]
  $region18: #{tpu_custom_call.1} parent=0
    _
  %s4 = ssub.s32 1, %s2
  %s5 = scalar_select 0, %s4, %s2
  $region1: #{tpu_custom_call.1} parent=0
    #allocation2 [shape = 'u8[4096]{0}', space=vmem, size = 0x1000, scoped, tag = 'input window, operand 0, single buffered']
    #allocation3 [shape = 's32[1]{0}', space=sflag, size = 0x4, scoped, tag = 'scoped memory for tpu_custom_call.1']
    #allocation4 [shape = 's32[1]{0}', space=sflag, size = 0x4, scoped, tag = 'scoped memory for tpu_custom_call.1']
    #allocation5 [shape = 'u8[4096]{0}', space=vmem, size = 0x1000, scoped, tag = 'output window, operand 0, single buffered']
    %6 = vsyncpa [#allocation3], 0
    %7 = vsyncpa [#allocation4], 0
    // Predicated region
    $region2: #{tpu_custom_call.1} parent=1 // pred_check
      _
    $region3: #{tpu_custom_call.1} parent=1 // pred_check_branch
      %9 = sbr.rel (0) target = $region5
    $region4: #{tpu_custom_call.1} parent=1 // pred_region
      %11 = vsyncadd [#allocation3], 0
      %s13 = sshll.u32 %s0, 4
      %s14 = int_to_ptr.hbm [resolvable:$true] %s13
      %s15 = sshll.u32 [#allocation2], 4
      %s16 = int_to_ptr.vmem [resolvable:$true] %s15
      %18 = dma.hbm_to_vmem [thread:$0]  %s14, 128, %s16, [#allocation3]
    $region5: #{tpu_custom_call.1} parent=1 // pred_fallthru
      _
    // Predicated region
    $region6: #{tpu_custom_call.1} parent=1 // pred_check
      _
    $region7: #{tpu_custom_call.1} parent=1 // pred_check_branch
      %20 = sbr.rel (0) target = $region9
    $region8: #{tpu_custom_call.1} parent=1 // pred_region
      %22 = dma.done [#allocation3], 128
    $region9: #{tpu_custom_call.1} parent=1 // pred_fallthru
      _
    %v23 = vld [vmem:[#allocation2] sm:$0xff]
    %24 = vrot.lane.b32.xlu0 %v23, 1
    %v25 = vpop.permute.xlu0 %24
    %26 = vst [vmem:[#allocation5] sm:$0xff] %v25
    // Predicated region
    $region10: #{tpu_custom_call.1} parent=1 // pred_check
      _
    $region11: #{tpu_custom_call.1} parent=1 // pred_check_branch
      %28 = sbr.rel (0) target = $region13
    $region12: #{tpu_custom_call.1} parent=1 // pred_region
      %30 = vsyncadd [#allocation4], 0
      %s32 = sshll.u32 [#allocation5], 4
      %s33 = int_to_ptr.vmem [resolvable:$true] %s32
      %s34 = sshll.u32 %s1, 4
      %s35 = int_to_ptr.hbm [resolvable:$true] %s34
      %37 = dma.vmem_to_hbm [thread:$0]  %s33, 128, %s35, [#allocation4]
    $region13: #{tpu_custom_call.1} parent=1 // pred_fallthru
      _
    // Predicated region
    $region14: #{tpu_custom_call.1} parent=1 // pred_check
      _
    $region15: #{tpu_custom_call.1} parent=1 // pred_check_branch
      %39 = sbr.rel (0) target = $region17
    $region16: #{tpu_custom_call.1} parent=1 // pred_region
      %41 = dma.done [#allocation4], 128
    $region17: #{tpu_custom_call.1} parent=1 // pred_fallthru
      _
    %42 = vsyncpa [#allocation3], 1
    %43 = vsyncpa [#allocation4], 1

</llo_original>
